<compile_context>
chip_gen: v6e
topology: v6e:2x2x1
jax: 0.10.0
libtpu: 0.0.40
codegen_flags: <defaults>
</compile_context>

<pallas_src>
import math

import jax
import jax.numpy as jnp
from jax import lax
from jax.experimental import pallas as pl
from jax.experimental.pallas import tpu as pltpu


def _make_ffn_kernel(chunk, n_chunks):
    """Fused FFN kernel: o = relu(x @ W1 + b1) @ W2 + b2 on one row tile."""

    def kernel(x_ref, w1_ref, b1_ref, w2_ref, b2_ref, o_ref):
        # x_ref : (tm, L_in)       lane-dense packed rows
        # w1_ref: (L_in, L_hid)    block-diagonal, pre-transposed (in, out)
        # b1_ref: (1, L_hid)       f32
        # w2_ref: (L_hid, L_in)    block-diagonal, pre-transposed (in, out)
        # b2_ref: (1, L_in)        f32
        w1 = w1_ref[...]
        b1 = b1_ref[...]
        w2 = w2_ref[...]
        b2 = b2_ref[...]

        def compute(x):
            # linear1 + ReLU (f32 accumulation on the MXU, bias/ReLU in f32)
            h = jnp.dot(x, w1, preferred_element_type=jnp.float32)
            h = jnp.maximum(h + b1, 0.0)
            # linear2
            y = jnp.dot(h.astype(x.dtype), w2,
                        preferred_element_type=jnp.float32)
            return y + b2

        if n_chunks == 1:
            o_ref[...] = compute(x_ref[...]).astype(o_ref.dtype)
        else:
            # Sub-chunk the row tile so the hidden intermediate stays small
            # while the DMA block (tm rows) stays large.
            def body(c, carry):
                r = pl.multiple_of(c * chunk, chunk)
                x = x_ref[pl.ds(r, chunk), :]
                o_ref[pl.ds(r, chunk), :] = compute(x).astype(o_ref.dtype)
                return carry

            lax.fori_loop(0, n_chunks, body, 0, unroll=(n_chunks <= 8))

    return kernel


def feedforward_forward(x, w1, b1, w2, b2, *, row_tile=2048):
    """x: (..., d_model); w1: (d_hidden, d_model); w2: (d_model, d_hidden).

    Matches PyTorch FeedForward: linear2(relu(linear1(x))).
    """
    orig_shape = x.shape
    d_model = orig_shape[-1]
    d_hidden = w1.shape[0]
    dtype = x.dtype

    # PyTorch `Linear` wrapper flattens leading dims; do the same here.
    n = math.prod(orig_shape[:-1])
    x2 = x.reshape(n, d_model)

    # ---- Lane-dense row packing ------------------------------------------
    # pack consecutive rows into the lane dimension so the kernel sees
    # >=128-lane operands (unmasked stores, full lane occupancy).
    if d_model % 128 == 0:
        pack = 1                       # already lane-dense
    else:
        pack = max(1, 128 // d_model)  # d_model=32 -> pack=4 -> 128 lanes

    n_pad = -(-n // pack) * pack
    if n_pad != n:
        x2 = jnp.pad(x2, ((0, n_pad - n), (0, 0)))
    n_packed = n_pad // pack
    lanes_in = pack * d_model
    lanes_hid = pack * d_hidden

    # Row-major (n_pad, d_model) is bit-identical to (n_packed, lanes_in).
    x_packed = x2.reshape(n_packed, lanes_in)

    # Block-diagonal weights keep packed rows independent; built once in XLA.
    # Pre-transposed to (in, out) so the kernel never transposes.
    w1t = jnp.transpose(w1).astype(dtype)            # (d_model, d_hidden)
    w2t = jnp.transpose(w2).astype(dtype)            # (d_hidden, d_model)
    eye = jnp.eye(pack, dtype=dtype)
    w1_blk = jnp.kron(eye, w1t)                      # (lanes_in, lanes_hid)
    w2_blk = jnp.kron(eye, w2t)                      # (lanes_hid, lanes_in)
    b1_blk = jnp.tile(b1.astype(jnp.float32), pack).reshape(1, lanes_hid)
    b2_blk = jnp.tile(b2.astype(jnp.float32), pack).reshape(1, lanes_in)

    # ---- Row tiling -------------------------------------------------------
    if n_packed <= 8:
        tm = n_packed                  # single full-array block (tiny case)
    else:
        # At least 2 grid steps so v7x's second TensorCore participates,
        # capped at row_tile; keep a multiple of 8 sublanes.
        half = -(-n_packed // 2)
        half = -(-half // 8) * 8
        tm = max(8, min(row_tile, half))
    grid = (pl.cdiv(n_packed, tm),)

    # Inner chunking for big tiles (keeps the hidden intermediate small).
    chunk = 512
    if tm <= chunk or tm % chunk != 0:
        chunk = tm
    n_chunks = tm // chunk

    kernel = _make_ffn_kernel(chunk, n_chunks)

    # Explicit scoped-VMEM budget: double-buffered x/out blocks + weights
    # + headroom; capped well under v7x's 64 MiB physical VMEM.
    itemsize = jnp.dtype(dtype).itemsize
    block_bytes = tm * lanes_in * itemsize
    weight_bytes = (w1_blk.size + w2_blk.size) * itemsize
    vmem_limit = int(min(28 * 1024 * 1024,
                         max(4 * 1024 * 1024,
                             4 * block_bytes + 4 * weight_bytes
                             + 2 * 1024 * 1024)))

    out_packed = pl.pallas_call(
        kernel,
        out_shape=jax.ShapeDtypeStruct((n_packed, lanes_in), dtype),
        grid_spec=pltpu.PrefetchScalarGridSpec(
            num_scalar_prefetch=0,
            grid=grid,
            in_specs=[
                pl.BlockSpec((tm, lanes_in), lambda i: (i, 0)),
                pl.BlockSpec((lanes_in, lanes_hid), lambda i: (0, 0)),
                pl.BlockSpec((1, lanes_hid), lambda i: (0, 0)),
                pl.BlockSpec((lanes_hid, lanes_in), lambda i: (0, 0)),
                pl.BlockSpec((1, lanes_in), lambda i: (0, 0)),
            ],
            out_specs=pl.BlockSpec((tm, lanes_in), lambda i: (i, 0)),
        ),
        compiler_params=pltpu.CompilerParams(
            dimension_semantics=("parallel",),
            vmem_limit_bytes=vmem_limit,
        ),
    )(x_packed, w1_blk, b1_blk, w2_blk, b2_blk)

    # Unpack: bit-identical reshape back, drop pad rows, restore leading dims.
    out = out_packed.reshape(n_pad, d_model)[:n]
    return out.reshape(orig_shape)


def feedforward_reference(x, w1, b1, w2, b2):
    """Pure-JAX reference mirroring the PyTorch module."""
    h = jnp.maximum(x @ w1.T + b1, 0.0)
    return h @ w2.T + b2


if __name__ == "__main__":
    # Small shapes consistent with the module's forward: (B, seq, d_model).
    B, T = 2, 8
    d_model, d_hidden = 32, 64

    key = jax.random.PRNGKey(0)
    kx, k1, k2, k3, k4 = jax.random.split(key, 5)

    x = jax.random.normal(kx, (B, T, d_model), jnp.float32)

    # Deterministic parameter init (PyTorch nn.Linear layout: W (out, in)).
    def init_w(rng, out_f, in_f):
        bound = 1.0 / math.sqrt(in_f)
        return jax.random.uniform(rng, (out_f, in_f), jnp.float32, -bound, bound)

    def init_b(rng, out_f, in_f):
        bound = 1.0 / math.sqrt(in_f)
        return jax.random.uniform(rng, (out_f,), jnp.float32, -bound, bound)

    w1 = init_w(k1, d_hidden, d_model)
    b1 = init_b(k2, d_hidden, d_model)
    w2 = init_w(k3, d_model, d_hidden)
    b2 = init_b(k4, d_model, d_hidden)

    out = feedforward_forward(x, w1, b1, w2, b2)
    out = jax.block_until_ready(out)

    ref = feedforward_reference(x, w1, b1, w2, b2)
    assert out.shape == (B, T, d_model), out.shape
    assert jnp.allclose(out, ref, atol=1e-4, rtol=1e-4), float(
        jnp.max(jnp.abs(out - ref)))

    print("KERNEL_OK")
</pallas_src>

<mosaic_0001>
module attributes {stable_mosaic.version = 11 : i64} {
  func.func @kernel(%arg0: i32, %arg1: memref<4x128xf32, #tpu.memory_space<vmem>>, %arg2: memref<128x256xf32, #tpu.memory_space<vmem>>, %arg3: memref<1x256xf32, #tpu.memory_space<vmem>>, %arg4: memref<256x128xf32, #tpu.memory_space<vmem>>, %arg5: memref<1x128xf32, #tpu.memory_space<vmem>>, %arg6: memref<4x128xf32, #tpu.memory_space<vmem>>) attributes {dimension_semantics = [#tpu.dimension_semantics<parallel>], iteration_bounds = array<i64: 1>, scalar_prefetch = 0 : i64, scratch_operands = 0 : i64, tpu.core_type = #tpu.core_type<tc>, window_params = [{transform_indices = @transform_0, window_bounds = array<i64: 4, 128>}, {pipeline_mode = #tpu.pipeline_mode<synchronous>, transform_indices = @transform_1, window_bounds = array<i64: 128, 256>}, {pipeline_mode = #tpu.pipeline_mode<synchronous>, transform_indices = @transform_2, window_bounds = array<i64: 1, 256>}, {pipeline_mode = #tpu.pipeline_mode<synchronous>, transform_indices = @transform_3, window_bounds = array<i64: 256, 128>}, {pipeline_mode = #tpu.pipeline_mode<synchronous>, transform_indices = @transform_4, window_bounds = array<i64: 1, 128>}, {transform_indices = @transform_5, window_bounds = array<i64: 4, 128>}]} {
    %c0 = arith.constant 0 : index
    %c0_0 = arith.constant 0 : index
    %0 = vector.load %arg2[%c0, %c0_0] : memref<128x256xf32, #tpu.memory_space<vmem>>, vector<128x256xf32>
    %c0_1 = arith.constant 0 : index
    %c0_2 = arith.constant 0 : index
    %1 = vector.load %arg3[%c0_1, %c0_2] : memref<1x256xf32, #tpu.memory_space<vmem>>, vector<1x256xf32>
    %c0_3 = arith.constant 0 : index
    %c0_4 = arith.constant 0 : index
    %2 = vector.load %arg4[%c0_3, %c0_4] : memref<256x128xf32, #tpu.memory_space<vmem>>, vector<256x128xf32>
    %c0_5 = arith.constant 0 : index
    %c0_6 = arith.constant 0 : index
    %3 = vector.load %arg5[%c0_5, %c0_6] : memref<1x128xf32, #tpu.memory_space<vmem>>, vector<1x128xf32>
    %c0_7 = arith.constant 0 : index
    %c0_8 = arith.constant 0 : index
    %4 = vector.load %arg1[%c0_7, %c0_8] : memref<4x128xf32, #tpu.memory_space<vmem>>, vector<4x128xf32>
    %cst = arith.constant dense<0.000000e+00> : vector<4x256xf32>
    %5 = tpu.matmul %4, %0, %cst {dimension_numbers = #tpu.dot_dimension_numbers<[1], [0], [0], [1], [0, 0, 1, 1], [], []>} : vector<4x128xf32>, vector<128x256xf32>, vector<4x256xf32> -> vector<4x256xf32>
    %6 = vector.broadcast %1 : vector<1x256xf32> to vector<4x256xf32>
    %7 = arith.addf %5, %6 : vector<4x256xf32>
    %cst_9 = arith.constant 0.000000e+00 : f32
    %8 = vector.broadcast %cst_9 : f32 to vector<4x256xf32>
    %9 = arith.maximumf %7, %8 : vector<4x256xf32>
    %cst_10 = arith.constant dense<0.000000e+00> : vector<4x128xf32>
    %10 = tpu.matmul %9, %2, %cst_10 {dimension_numbers = #tpu.dot_dimension_numbers<[1], [0], [0], [1], [0, 0, 1, 1], [], []>} : vector<4x256xf32>, vector<256x128xf32>, vector<4x128xf32> -> vector<4x128xf32>
    %11 = vector.broadcast %3 : vector<1x128xf32> to vector<4x128xf32>
    %12 = arith.addf %10, %11 : vector<4x128xf32>
    %c0_11 = arith.constant 0 : index
    %c0_12 = arith.constant 0 : index
    %13 = vector.load %arg6[%c0_11, %c0_12] : memref<4x128xf32, #tpu.memory_space<vmem>>, vector<4x128xf32>
    tpu.vector_store %arg6[%c0_11, %c0_12], %12 {strides = array<i32>} : memref<4x128xf32, #tpu.memory_space<vmem>>, vector<4x128xf32>,
    return
  }
  func.func @transform_0(%arg0: i32) -> (i32, i32) {
    %c0_i32 = arith.constant 0 : i32
    %c0_i32_0 = arith.constant 0 : i32
    return %arg0, %c0_i32 : i32, i32
  }
  func.func @transform_1(%arg0: i32) -> (i32, i32) {
    %c0_i32 = arith.constant 0 : i32
    %c0_i32_0 = arith.constant 0 : i32
    %c0_i32_1 = arith.constant 0 : i32
    return %c0_i32, %c0_i32_0 : i32, i32
  }
  func.func @transform_2(%arg0: i32) -> (i32, i32) {
    %c0_i32 = arith.constant 0 : i32
    %c0_i32_0 = arith.constant 0 : i32
    %c0_i32_1 = arith.constant 0 : i32
    return %c0_i32, %c0_i32_0 : i32, i32
  }
  func.func @transform_3(%arg0: i32) -> (i32, i32) {
    %c0_i32 = arith.constant 0 : i32
    %c0_i32_0 = arith.constant 0 : i32
    %c0_i32_1 = arith.constant 0 : i32
    return %c0_i32, %c0_i32_0 : i32, i32
  }
  func.func @transform_4(%arg0: i32) -> (i32, i32) {
    %c0_i32 = arith.constant 0 : i32
    %c0_i32_0 = arith.constant 0 : i32
    %c0_i32_1 = arith.constant 0 : i32
    return %c0_i32, %c0_i32_0 : i32, i32
  }
  func.func @transform_5(%arg0: i32) -> (i32, i32) {
    %c0_i32 = arith.constant 0 : i32
    %c0_i32_0 = arith.constant 0 : i32
    return %arg0, %c0_i32 : i32, i32
  }
}

</mosaic_0001>

<llo_original>
// kernel: tpu_custom_call.1
$region0: #{tpu_custom_call.1}
  #allocation0 [shape = 'u32[]', space=smem, size = 0x4, offset = 0x4, fixed_abs, tag = 'smem constant byte address 0x4 - core index']
  #allocation1 [shape = 'u32[144,128]{1,0:T(1,128)}', space=vmem, size = 0x12000, scoped, tag = 'internal scratch']
  %s0 = inlined_call_operand.hbm [shape: f32[4,128], index: 0, kind: input, shape index: {}]
  %s1 = inlined_call_operand.hbm [shape: f32[128,256], index: 1, kind: input, shape index: {}]
  %s2 = inlined_call_operand.vmem [shape: f32[1,256], index: 2, kind: input, shape index: {}]
  %s3 = inlined_call_operand.hbm [shape: f32[256,128], index: 3, kind: input, shape index: {}]
  %s4 = inlined_call_operand.vmem [shape: f32[1,128], index: 4, kind: input, shape index: {}]
  %s5 = inlined_call_operand.hbm [shape: f32[4,128], index: 5, kind: output, shape index: {}]
  %s6 = sld [smem:[#allocation0]]
  $region42: #{tpu_custom_call.1} parent=0
    _
  %s8 = ssub.s32 1, %s6
  %s9 = scalar_select 0, %s8, %s6
  $region1: #{tpu_custom_call.1} parent=0
    #allocation2 [shape = 'u8[2048]{0}', space=vmem, size = 0x800, scoped, tag = 'input window, operand 0, single buffered']
    #allocation3 [shape = 's32[1]{0}', space=sflag, size = 0x4, scoped, tag = 'scoped memory for tpu_custom_call.1']
    #allocation4 [shape = 's32[1]{0}', space=sflag, size = 0x4, scoped, tag = 'scoped memory for tpu_custom_call.1']
    #allocation5 [shape = 'u8[131072]{0}', space=vmem, size = 0x20000, scoped, tag = 'input window, operand 1, single buffered']
    #allocation6 [shape = 's32[1]{0}', space=sflag, size = 0x4, scoped, tag = 'scoped memory for tpu_custom_call.1']
    #allocation7 [shape = 'u8[131072]{0}', space=vmem, size = 0x20000, scoped, tag = 'input window, operand 3, single buffered']
    #allocation8 [shape = 'u8[2048]{0}', space=vmem, size = 0x800, scoped, tag = 'output window, operand 0, single buffered']
    %10 = vsyncpa [#allocation3], 0
    %11 = vsyncpa [#allocation6], 0
    %12 = vsyncpa [#allocation4], 0
    // Predicated region
    $region2: #{tpu_custom_call.1} parent=1 // pred_check
      _
    $region3: #{tpu_custom_call.1} parent=1 // pred_check_branch
      %14 = sbr.rel (0) target = $region5
    $region4: #{tpu_custom_call.1} parent=1 // pred_region
      %s16 = ssub.s32 64, 64
      %17 = vsyncadd [#allocation3], %s16
      %s19 = sshll.u32 [#allocation2], 4
      %s20 = int_to_ptr.vmem [resolvable:$true] %s19
      %22 = dma.hbm_to_vmem [thread:$0]  %s0, 64, %s20, [#allocation3]
    $region5: #{tpu_custom_call.1} parent=1 // pred_fallthru
      _
    // Predicated region
    $region6: #{tpu_custom_call.1} parent=1 // pred_check
      _
    $region7: #{tpu_custom_call.1} parent=1 // pred_check_branch
      %24 = sbr.rel (0) target = $region9
    $region8: #{tpu_custom_call.1} parent=1 // pred_region
      %s26 = ssub.s32 4096, 4096
      %27 = vsyncadd [#allocation6], %s26
      %s28 = sshll.u32 [#allocation5], 4
      %s29 = int_to_ptr.vmem [resolvable:$true] %s28
      %34 = dma.hbm_to_vmem [thread:$0]  %s1, 4096, %s29, [#allocation6], 256, 256, 16
    $region9: #{tpu_custom_call.1} parent=1 // pred_fallthru
      _
    // Predicated region
    $region10: #{tpu_custom_call.1} parent=1 // pred_check
      _
    $region11: #{tpu_custom_call.1} parent=1 // pred_check_branch
      %36 = sbr.rel (0) target = $region13
    $region12: #{tpu_custom_call.1} parent=1 // pred_region
      _
    $region13: #{tpu_custom_call.1} parent=1 // pred_fallthru
      _
    // Predicated region
    $region14: #{tpu_custom_call.1} parent=1 // pred_check
      _
    $region15: #{tpu_custom_call.1} parent=1 // pred_check_branch
      %38 = sbr.rel (0) target = $region17
    $region16: #{tpu_custom_call.1} parent=1 // pred_region
      %s40 = ssub.s32 4096, 4096
      %41 = vsyncadd [#allocation6], %s40
      %s42 = sshll.u32 [#allocation7], 4
      %s43 = int_to_ptr.vmem [resolvable:$true] %s42
      %48 = dma.hbm_to_vmem [thread:$0]  %s3, 4096, %s43, [#allocation6], 128, 128, 8
    $region17: #{tpu_custom_call.1} parent=1 // pred_fallthru
      _
    // Predicated region
    $region18: #{tpu_custom_call.1} parent=1 // pred_check
      _
    $region19: #{tpu_custom_call.1} parent=1 // pred_check_branch
      %50 = sbr.rel (0) target = $region21
    $region20: #{tpu_custom_call.1} parent=1 // pred_region
      _
    $region21: #{tpu_custom_call.1} parent=1 // pred_fallthru
      _
    // Predicated region
    $region22: #{tpu_custom_call.1} parent=1 // pred_check
      _
    $region23: #{tpu_custom_call.1} parent=1 // pred_check_branch
      %52 = sbr.rel (0) target = $region25
    $region24: #{tpu_custom_call.1} parent=1 // pred_region
      %53 = dma.done [#allocation3], 64
    $region25: #{tpu_custom_call.1} parent=1 // pred_fallthru
      _
    // Predicated region
    $region26: #{tpu_custom_call.1} parent=1 // pred_check
      _
    $region27: #{tpu_custom_call.1} parent=1 // pred_check_branch
      %55 = sbr.rel (0) target = $region29
    $region28: #{tpu_custom_call.1} parent=1 // pred_region
      %56 = dma.done [#allocation6], 4096
    $region29: #{tpu_custom_call.1} parent=1 // pred_fallthru
      _
    // Predicated region
    $region30: #{tpu_custom_call.1} parent=1 // pred_check
      _
    $region31: #{tpu_custom_call.1} parent=1 // pred_check_branch
      %58 = sbr.rel (0) target = $region33
    $region32: #{tpu_custom_call.1} parent=1 // pred_region
      %59 = dma.done [#allocation6], 4096
    $region33: #{tpu_custom_call.1} parent=1 // pred_fallthru
      _
    %v60 = vld [vmem:[#allocation5] sm:$0xff]
    %v61 = vld [vmem:[#allocation5 + $0x8] sm:$0xff]
    %v62 = vld [vmem:[#allocation5 + $0x10] sm:$0xff]
    %v63 = vld [vmem:[#allocation5 + $0x18] sm:$0xff]
    %v64 = vld [vmem:[#allocation5 + $0x20] sm:$0xff]
    %v65 = vld [vmem:[#allocation5 + $0x28] sm:$0xff]
    %v66 = vld [vmem:[#allocation5 + $0x30] sm:$0xff]
    %v67 = vld [vmem:[#allocation5 + $0x38] sm:$0xff]
    %v68 = vld [vmem:[#allocation5 + $0x40] sm:$0xff]
    %v69 = vld [vmem:[#allocation5 + $0x48] sm:$0xff]
    %v70 = vld [vmem:[#allocation5 + $0x50] sm:$0xff]
    %v71 = vld [vmem:[#allocation5 + $0x58] sm:$0xff]
    %v72 = vld [vmem:[#allocation5 + $0x60] sm:$0xff]
    %v73 = vld [vmem:[#allocation5 + $0x68] sm:$0xff]
    %v74 = vld [vmem:[#allocation5 + $0x70] sm:$0xff]
    %v75 = vld [vmem:[#allocation5 + $0x78] sm:$0xff]
    %v76 = vld [vmem:[#allocation5 + $0x80] sm:$0xff]
    %v77 = vld [vmem:[#allocation5 + $0x88] sm:$0xff]
    %v78 = vld [vmem:[#allocation5 + $0x90] sm:$0xff]
    %v79 = vld [vmem:[#allocation5 + $0x98] sm:$0xff]
    %v80 = vld [vmem:[#allocation5 + $0xa0] sm:$0xff]
    %v81 = vld [vmem:[#allocation5 + $0xa8] sm:$0xff]
    %v82 = vld [vmem:[#allocation5 + $0xb0] sm:$0xff]
    %v83 = vld [vmem:[#allocation5 + $0xb8] sm:$0xff]
    %v84 = vld [vmem:[#allocation5 + $0xc0] sm:$0xff]
    %v85 = vld [vmem:[#allocation5 + $0xc8] sm:$0xff]
    %v86 = vld [vmem:[#allocation5 + $0xd0] sm:$0xff]
    %v87 = vld [vmem:[#allocation5 + $0xd8] sm:$0xff]
    %v88 = vld [vmem:[#allocation5 + $0xe0] sm:$0xff]
    %v89 = vld [vmem:[#allocation5 + $0xe8] sm:$0xff]
    %v90 = vld [vmem:[#allocation5 + $0xf0] sm:$0xff]
    %v91 = vld [vmem:[#allocation5 + $0xf8] sm:$0xff]
    %v92 = vld [vmem:[%s2] sm:$0x3]
    %v93 = vld [vmem:[#allocation7] sm:$0xff]
    %v94 = vld [vmem:[#allocation7 + $0x8] sm:$0xff]
    %v95 = vld [vmem:[#allocation7 + $0x10] sm:$0xff]
    %v96 = vld [vmem:[#allocation7 + $0x18] sm:$0xff]
    %v97 = vld [vmem:[#allocation7 + $0x20] sm:$0xff]
    %v98 = vld [vmem:[#allocation7 + $0x28] sm:$0xff]
    %v99 = vld [vmem:[#allocation7 + $0x30] sm:$0xff]
    %v100 = vld [vmem:[#allocation7 + $0x38] sm:$0xff]
    %v101 = vld [vmem:[#allocation7 + $0x40] sm:$0xff]
    %v102 = vld [vmem:[#allocation7 + $0x48] sm:$0xff]
    %v103 = vld [vmem:[#allocation7 + $0x50] sm:$0xff]
    %v104 = vld [vmem:[#allocation7 + $0x58] sm:$0xff]
    %v105 = vld [vmem:[#allocation7 + $0x60] sm:$0xff]
    %v106 = vld [vmem:[#allocation7 + $0x68] sm:$0xff]
    %v107 = vld [vmem:[#allocation7 + $0x70] sm:$0xff]
    %v108 = vld [vmem:[#allocation7 + $0x78] sm:$0xff]
    %v109 = vld [vmem:[#allocation7 + $0x80] sm:$0xff]
    %v110 = vld [vmem:[#allocation7 + $0x88] sm:$0xff]
    %v111 = vld [vmem:[#allocation7 + $0x90] sm:$0xff]
    %v112 = vld [vmem:[#allocation7 + $0x98] sm:$0xff]
    %v113 = vld [vmem:[#allocation7 + $0xa0] sm:$0xff]
    %v114 = vld [vmem:[#allocation7 + $0xa8] sm:$0xff]
    %v115 = vld [vmem:[#allocation7 + $0xb0] sm:$0xff]
    %v116 = vld [vmem:[#allocation7 + $0xb8] sm:$0xff]
    %v117 = vld [vmem:[#allocation7 + $0xc0] sm:$0xff]
    %v118 = vld [vmem:[#allocation7 + $0xc8] sm:$0xff]
    %v119 = vld [vmem:[#allocation7 + $0xd0] sm:$0xff]
    %v120 = vld [vmem:[#allocation7 + $0xd8] sm:$0xff]
    %v121 = vld [vmem:[#allocation7 + $0xe0] sm:$0xff]
    %v122 = vld [vmem:[#allocation7 + $0xe8] sm:$0xff]
    %v123 = vld [vmem:[#allocation7 + $0xf0] sm:$0xff]
    %v124 = vld [vmem:[#allocation7 + $0xf8] sm:$0xff]
    %v125 = vld [vmem:[%s4] sm:$0x1]
    %v126 = vld [vmem:[#allocation2] sm:$0xf]
    %v128 = vlaneseq
    %v129 = vshrl.u32 %v128, 7
    %v130 = vsub.s32 0, %v129
    %v131 = vrot.slane %v92, %v130
    %v132 = vlaneseq
    %v133 = vshrl.u32 %v132, 7
    %v134 = vsub.s32 1, %v133
    %v135 = vrot.slane %v92, %v134
    %138 = vmatprep.subr.mxu0 %v91
    %139 = vmatpush1.msra.mxu0 %v90
    %140 = vmatprep.subr.mxu0 %v89
    %141 = vmatpush1.msra.mxu0 %v88
    %142 = vmatprep.subr.mxu0 %v87
    %143 = vmatpush1.msra.mxu0 %v86
    %144 = vmatprep.subr.mxu0 %v85
    %145 = vmatpush1.msra.mxu0 %v84
    %146 = vmatprep.subr.mxu0 %v83
    %147 = vmatpush1.msra.mxu0 %v82
    %148 = vmatprep.subr.mxu0 %v81
    %149 = vmatpush1.msra.mxu0 %v80
    %150 = vmatprep.subr.mxu0 %v79
    %151 = vmatpush1.msra.mxu0 %v78
    %152 = vmatprep.subr.mxu0 %v77
    %153 = vmatpush1.msra.mxu0 %v76
    %154 = vmatprep.subr.mxu0 %v75
    %155 = vmatpush1.msra.mxu0 %v74
    %156 = vmatprep.subr.mxu0 %v73
    %157 = vmatpush1.msra.mxu0 %v72
    %158 = vmatprep.subr.mxu0 %v71
    %159 = vmatpush1.msra.mxu0 %v70
    %160 = vmatprep.subr.mxu0 %v69
    %161 = vmatpush1.msra.mxu0 %v68
    %162 = vmatprep.subr.mxu0 %v67
    %163 = vmatpush1.msra.mxu0 %v66
    %164 = vmatprep.subr.mxu0 %v65
    %165 = vmatpush1.msra.mxu0 %v64
    %166 = vmatprep.subr.mxu0 %v63
    %167 = vmatpush1.msra.mxu0 %v62
    %168 = vmatprep.subr.mxu0 %v61
    %169 = vmatpush1.msra.mxu0 %v60
    %170 = vmatprep.subr.mxu0 0.0
    %171 = vmatpush2.msra.mxu0 0.0
    %172 = vmatprep.subr.mxu0 0.0
    %173 = vmatpush2.msra.mxu0 0.0
    %174 = vmatprep.subr.mxu0 0.0
    %175 = vmatpush2.msra.mxu0 0.0
    %176 = vmatprep.subr.mxu0 0.0
    %177 = vmatpush2.msra.mxu0 0.0
    %178 = vmatprep.subr.mxu0 0.0
    %179 = vmatpush2.msra.mxu0 0.0
    %180 = vmatprep.subr.mxu0 0.0
    %181 = vmatpush2.msra.mxu0 0.0
    %182 = vmatprep.subr.mxu0 0.0
    %183 = vmatpush2.msra.mxu0 0.0
    %184 = vmatprep.subr.mxu0 0.0
    %185 = vmatpush2.msra.mxu0 0.0
    %186 = vmatprep.subr.mxu0 0.0
    %187 = vmatpush2.msra.mxu0 0.0
    %188 = vmatprep.subr.mxu0 0.0
    %189 = vmatpush2.msra.mxu0 0.0
    %190 = vmatprep.subr.mxu0 0.0
    %191 = vmatpush2.msra.mxu0 0.0
    %192 = vmatprep.subr.mxu0 0.0
    %193 = vmatpush2.msra.mxu0 0.0
    %194 = vmatprep.subr.mxu0 0.0
    %195 = vmatpush2.msra.mxu0 0.0
    %196 = vmatprep.subr.mxu0 0.0
    %197 = vmatpush2.msra.mxu0 0.0
    %198 = vmatprep.subr.mxu0 0.0
    %199 = vmatpush2.msra.mxu0 0.0
    %200 = vmatprep.subr.mxu0 0.0
    %201 = vmatpush2.msra.mxu0 0.0
    %202 = vmatprep.mubr.f32.mxu0 0.0
    %203 = vmatmul.mubr.f32.gmra.mxu0 %v126
    %v204 = vpop.f32.mrf.mxu0
    %v205 = vadd.f32 %v131, %v204
    %v206 = vpop.f32.mrf.mxu0
    %v207 = vadd.f32 %v135, %v206
    %208 = vdwg.mxu0
    %v209 = vmax.f32 %v205, 0.0
    %v210 = vmax.f32 %v207, 0.0
    %v212 = vlaneseq
    %v213 = vshrl.u32 %v212, 7
    %v214 = vsub.s32 0, %v213
    %v215 = vrot.slane %v125, %v214
    %217 = vmatprep.subr.mxu0 0.0
    %218 = vmatpush1.msra.mxu0 %v108
    %219 = vmatprep.subr.mxu0 0.0
    %220 = vmatpush1.msra.mxu0 %v107
    %221 = vmatprep.subr.mxu0 0.0
    %222 = vmatpush1.msra.mxu0 %v106
    %223 = vmatprep.subr.mxu0 0.0
    %224 = vmatpush1.msra.mxu0 %v105
    %225 = vmatprep.subr.mxu0 0.0
    %226 = vmatpush1.msra.mxu0 %v104
    %227 = vmatprep.subr.mxu0 0.0
    %228 = vmatpush1.msra.mxu0 %v103
    %229 = vmatprep.subr.mxu0 0.0
    %230 = vmatpush1.msra.mxu0 %v102
    %231 = vmatprep.subr.mxu0 0.0
    %232 = vmatpush1.msra.mxu0 %v101
    %233 = vmatprep.subr.mxu0 0.0
    %234 = vmatpush1.msra.mxu0 %v100
    %235 = vmatprep.subr.mxu0 0.0
    %236 = vmatpush1.msra.mxu0 %v99
    %237 = vmatprep.subr.mxu0 0.0
    %238 = vmatpush1.msra.mxu0 %v98
    %239 = vmatprep.subr.mxu0 0.0
    %240 = vmatpush1.msra.mxu0 %v97
    %241 = vmatprep.subr.mxu0 0.0
    %242 = vmatpush1.msra.mxu0 %v96
    %243 = vmatprep.subr.mxu0 0.0
    %244 = vmatpush1.msra.mxu0 %v95
    %245 = vmatprep.subr.mxu0 0.0
    %246 = vmatpush1.msra.mxu0 %v94
    %247 = vmatprep.subr.mxu0 0.0
    %248 = vmatpush1.msra.mxu0 %v93
    %249 = vmatprep.subr.mxu0 0.0
    %250 = vmatpush2.msra.mxu0 %v124
    %251 = vmatprep.subr.mxu0 0.0
    %252 = vmatpush2.msra.mxu0 %v123
    %253 = vmatprep.subr.mxu0 0.0
    %254 = vmatpush2.msra.mxu0 %v122
    %255 = vmatprep.subr.mxu0 0.0
    %256 = vmatpush2.msra.mxu0 %v121
    %257 = vmatprep.subr.mxu0 0.0
    %258 = vmatpush2.msra.mxu0 %v120
    %259 = vmatprep.subr.mxu0 0.0
    %260 = vmatpush2.msra.mxu0 %v119
    %261 = vmatprep.subr.mxu0 0.0
    %262 = vmatpush2.msra.mxu0 %v118
    %263 = vmatprep.subr.mxu0 0.0
    %264 = vmatpush2.msra.mxu0 %v117
    %265 = vmatprep.subr.mxu0 0.0
    %266 = vmatpush2.msra.mxu0 %v116
    %267 = vmatprep.subr.mxu0 0.0
    %268 = vmatpush2.msra.mxu0 %v115
    %269 = vmatprep.subr.mxu0 0.0
    %270 = vmatpush2.msra.mxu0 %v114
    %271 = vmatprep.subr.mxu0 0.0
    %272 = vmatpush2.msra.mxu0 %v113
    %273 = vmatprep.subr.mxu0 0.0
    %274 = vmatpush2.msra.mxu0 %v112
    %275 = vmatprep.subr.mxu0 0.0
    %276 = vmatpush2.msra.mxu0 %v111
    %277 = vmatprep.subr.mxu0 0.0
    %278 = vmatpush2.msra.mxu0 %v110
    %279 = vmatprep.subr.mxu0 0.0
    %280 = vmatpush2.msra.mxu0 %v109
    %281 = vmatprep.mubr.f32.mxu0 %v210
    %282 = vmatmul.mubr.f32.gmra.mxu0 %v209
    %v283 = vpop.f32.mrf.mxu0
    %v284 = vadd.f32 %v215, %v283
    %v285 = vpop.f32.mrf.mxu0
    %286 = vdwg.mxu0
    %287 = vst [vmem:[#allocation8] sm:$0xf] %v284
    // Predicated region
    $region34: #{tpu_custom_call.1} parent=1 // pred_check
      _
    $region35: #{tpu_custom_call.1} parent=1 // pred_check_branch
      %289 = sbr.rel (0) target = $region37
    $region36: #{tpu_custom_call.1} parent=1 // pred_region
      %s291 = ssub.s32 64, 64
      %292 = vsyncadd [#allocation4], %s291
      %s294 = sshll.u32 [#allocation8], 4
      %s295 = int_to_ptr.vmem [resolvable:$true] %s294
      %297 = dma.vmem_to_hbm [thread:$0]  %s295, 64, %s5, [#allocation4]
    $region37: #{tpu_custom_call.1} parent=1 // pred_fallthru
      _
    // Predicated region
    $region38: #{tpu_custom_call.1} parent=1 // pred_check
      _
    $region39: #{tpu_custom_call.1} parent=1 // pred_check_branch
      %299 = sbr.rel (0) target = $region41
    $region40: #{tpu_custom_call.1} parent=1 // pred_region
      %300 = dma.done [#allocation4], 64
    $region41: #{tpu_custom_call.1} parent=1 // pred_fallthru
      _
    %301 = vsyncpa [#allocation3], 1
    %302 = vsyncpa [#allocation6], 1
    %303 = vsyncpa [#allocation4], 1

</llo_original>
